<compile_context>
chip_gen: v5e
topology: v5e:2x2
jax: 0.10.0
libtpu: 0.0.40
codegen_flags: <defaults>
</compile_context>

<pallas_src>
import functools
import math

import jax
import jax.numpy as jnp
from jax import lax
from jax.experimental import pallas as pl
from jax.experimental.pallas import tpu as pltpu


# ----------------------------------------------------------------------------
# Shared per-head attention body (operates on VMEM scratch refs).
# ----------------------------------------------------------------------------
def _attend_heads(q_scr, k_scr, v_scr, ctx_scr, *, num_heads, d_k, scale,
                  v_col_offset):
    """Per-head scaled-dot-product attention.

    q_scr : (Tq, D) projected queries          (compute dtype)
    k_scr : (S, D)  projected keys             (compute dtype)
    v_scr : (S, D or 2D) projected values; head h lives at columns
            [v_col_offset + h*d_k, ... + d_k)  (compute dtype)
    ctx_scr: (Tq, D) merged per-head contexts  (compute dtype)
    """
    # Contract last dims of q and k directly (q @ k^T) — no materialized
    # transpose of k (checked: Mosaic lowers this without a per-head vxpose).
    dn = (((1,), (1,)), ((), ()))

    def head(h):
        off = h * d_k
        if not isinstance(off, int):          # traced index from fori_loop
            off = pl.multiple_of(off, d_k)
        qh = q_scr[:, pl.ds(off, d_k)]                       # (Tq, d_k)
        kh = k_scr[:, pl.ds(off, d_k)]                       # (S,  d_k)
        vh = v_scr[:, pl.ds(v_col_offset + off, d_k)]        # (S,  d_k)

        s = lax.dot_general(qh, kh, dn,
                            preferred_element_type=jnp.float32) * scale
        # Softmax statistics strictly in f32 (required esp. once operands
        # are bf16; v5e has no bf16 VPU/EUP path anyway).
        m = jnp.max(s, axis=-1, keepdims=True)
        e = jnp.exp(s - m)
        inv = pl.reciprocal(jnp.sum(e, axis=-1, keepdims=True), approx=True)
        p = (e * inv).astype(vh.dtype)

        # Head context lands directly in its D-column slot — no later
        # transpose/concat; the final store stays lane-dense (last dim = D).
        ctx_scr[:, pl.ds(off, d_k)] = jnp.dot(
            p, vh, preferred_element_type=jnp.float32).astype(ctx_scr.dtype)

    if num_heads <= 4:
        # Short fixed trip-count: unroll for LLO scheduler visibility.
        for h in range(num_heads):
            head(h)
    else:
        # Bound live ranges per head (avoids vreg spills with many heads).
        def body(h, carry):
            head(h)
            return carry
        lax.fori_loop(0, num_heads, body, 0, unroll=False)


# ----------------------------------------------------------------------------
# Kernels: one (batch, q-tile) pair per grid step.
# ----------------------------------------------------------------------------
def _mha_kernel(q_ref, k_ref, v_ref, wq_ref, wk_ref, wv_ref, wo_ref, o_ref,
                q_scr, k_scr, v_scr, ctx_scr, *, num_heads):
    """General path: distinct query / key / value activations."""
    D = wq_ref.shape[-1]
    d_k = D // num_heads
    scale = 1.0 / math.sqrt(d_k)

    # K/V projections depend only on the batch index -> compute once per
    # batch element (first q-tile step) and keep resident in VMEM scratch.
    @pl.when(pl.program_id(1) == 0)
    def _():
        k_scr[...] = jnp.dot(k_ref[0], wk_ref[...],
                             preferred_element_type=jnp.float32
                             ).astype(k_scr.dtype)
        v_scr[...] = jnp.dot(v_ref[0], wv_ref[...],
                             preferred_element_type=jnp.float32
                             ).astype(v_scr.dtype)

    q_scr[...] = jnp.dot(q_ref[0], wq_ref[...],
                         preferred_element_type=jnp.float32
                         ).astype(q_scr.dtype)

    _attend_heads(q_scr, k_scr, v_scr, ctx_scr, num_heads=num_heads,
                  d_k=d_k, scale=scale, v_col_offset=0)

    # Output projection straight out of VMEM; lane-dense (Tq, D) store.
    o_ref[0] = jnp.dot(ctx_scr[...], wo_ref[...],
                       preferred_element_type=jnp.float32).astype(o_ref.dtype)


def _mha_shared_kv_kernel(q_ref, kv_ref, wq_ref, wkv_ref, wo_ref, o_ref,
                          q_scr, kv_scr, ctx_scr, *, num_heads):
    """Fast path (key is value): fused (S, D) @ (D, 2D) K/V projection."""
    D = wq_ref.shape[-1]
    d_k = D // num_heads
    scale = 1.0 / math.sqrt(d_k)

    @pl.when(pl.program_id(1) == 0)
    def _():
        kv_scr[...] = jnp.dot(kv_ref[0], wkv_ref[...],
                              preferred_element_type=jnp.float32
                              ).astype(kv_scr.dtype)

    q_scr[...] = jnp.dot(q_ref[0], wq_ref[...],
                         preferred_element_type=jnp.float32
                         ).astype(q_scr.dtype)

    _attend_heads(q_scr, kv_scr, kv_scr, ctx_scr, num_heads=num_heads,
                  d_k=d_k, scale=scale, v_col_offset=D)

    o_ref[0] = jnp.dot(ctx_scr[...], wo_ref[...],
                       preferred_element_type=jnp.float32).astype(o_ref.dtype)


# ----------------------------------------------------------------------------
# Wrapper.
# ----------------------------------------------------------------------------
def _pick_q_tile(S, q_tile):
    if S <= q_tile:
        return S
    for t in (q_tile, 512, 256, 128, 64, 32, 16, 8):
        if t <= q_tile and S % t == 0:
            return t
    return S  # no clean divisor -> fall back to a single whole-S tile


def multi_head_attention(query, key, value, w_q_t, w_k_t, w_v_t, w_o_t,
                         num_heads, *, compute_dtype=jnp.float32, q_tile=256):
    """Pallas forward pass equivalent to MultiHeadAttention.forward (mask=None).

    Weights are stored pre-transposed, shape (in, out) = (D, D), so the kernel
    computes y = x @ W_t == x @ W.T (matches nn.Linear(bias=False)).
    `compute_dtype=jnp.bfloat16` runs all five matmuls with bf16 operands and
    f32 accumulation (v6e/v7x MXU fast path); softmax math stays f32.
    """
    B, S, D = query.shape
    assert D % num_heads == 0, "d_model must be divisible by num_heads"
    out_dtype = query.dtype

    shared_kv = key is value          # decide fast path on the original args
    fully_shared = shared_kv and (query is key)

    cd = jnp.dtype(compute_dtype)

    def cast(x):
        return x if x.dtype == cd else x.astype(cd)

    Tq = _pick_q_tile(S, q_tile)
    n_q = S // Tq

    q_spec = pl.BlockSpec((1, Tq, D), lambda b, qi: (b, qi, 0))
    kv_full_spec = pl.BlockSpec((1, S, D), lambda b, qi: (b, 0, 0))
    out_spec = pl.BlockSpec((1, Tq, D), lambda b, qi: (b, qi, 0))

    def w_spec(shape):
        # Constant index_map -> weights stay resident across the whole grid;
        # Buffered(1) drops the useless second pipeline buffer (halves weight
        # VMEM — matters on v7x's 64 MiB).
        return pl.BlockSpec(shape, lambda b, qi: (0, 0),
                            pipeline_mode=pl.Buffered(1))

    if shared_kv:
        kv = cast(key)
        qx = kv if fully_shared else cast(query)
        w_kv = jnp.concatenate([cast(w_k_t), cast(w_v_t)], axis=1)  # (D, 2D)
        kernel = functools.partial(_mha_shared_kv_kernel, num_heads=num_heads)
        in_specs = [q_spec, kv_full_spec,
                    w_spec((D, D)), w_spec((D, 2 * D)), w_spec((D, D))]
        args = (qx, kv, cast(w_q_t), w_kv, cast(w_o_t))
        scratch = [pltpu.VMEM((Tq, D), cd),       # projected q
                   pltpu.VMEM((S, 2 * D), cd),    # projected [k | v]
                   pltpu.VMEM((Tq, D), cd)]       # merged head contexts
        n_kv_inputs = 1
    else:
        kernel = functools.partial(_mha_kernel, num_heads=num_heads)
        in_specs = [q_spec, kv_full_spec, kv_full_spec,
                    w_spec((D, D)), w_spec((D, D)), w_spec((D, D)),
                    w_spec((D, D))]
        args = (cast(query), cast(key), cast(value),
                cast(w_q_t), cast(w_k_t), cast(w_v_t), cast(w_o_t))
        scratch = [pltpu.VMEM((Tq, D), cd), pltpu.VMEM((S, D), cd),
                   pltpu.VMEM((S, D), cd), pltpu.VMEM((Tq, D), cd)]
        n_kv_inputs = 2

    # --- explicit scoped-VMEM budget (defaults are only 16/32 MiB) ---------
    act_bytes = cd.itemsize
    out_bytes = jnp.dtype(out_dtype).itemsize
    vmem_need = (
        2 * Tq * D * act_bytes                       # q input block (x2 bufs)
        + n_kv_inputs * 2 * S * D * act_bytes        # k/v input blocks (x2 bufs)
        + 4 * D * D * act_bytes                      # weights (single-buffered)
        + 2 * Tq * D * out_bytes                     # output block (x2 bufs)
        + (2 * Tq * D + 2 * S * D) * act_bytes       # scratch (q, k, v, ctx)
        + 2 * Tq * S * 4                             # live f32 score/exp tiles
    )
    vmem_limit = max(min(int(vmem_need * 1.3), 64 * 1024 * 1024),
                     32 * 1024 * 1024)

    # --- advisory cost estimate for XLA scheduling around the custom call --
    n_act = 1 if fully_shared else (2 if shared_kv else 3)
    flops = B * (8 * S * D * D + 4 * S * S * D)
    transcendentals = B * num_heads * S * S
    bytes_accessed = (n_act * B * S * D + 4 * D * D) * act_bytes \
        + B * S * D * out_bytes

    return pl.pallas_call(
        kernel,
        out_shape=jax.ShapeDtypeStruct((B, S, D), out_dtype),
        grid=(B, n_q),
        in_specs=in_specs,
        out_specs=out_spec,
        scratch_shapes=scratch,
        compiler_params=pltpu.CompilerParams(
            # batch axis parallel (megacore); q-tile axis arbitrary because
            # the K/V projection computed at qi==0 is reused from scratch.
            dimension_semantics=("parallel", "arbitrary"),
            vmem_limit_bytes=vmem_limit),
        cost_estimate=pl.CostEstimate(flops=flops,
                                      transcendentals=transcendentals,
                                      bytes_accessed=bytes_accessed),
    )(*args)


# ----------------------------------------------------------------------------
# Pure-JAX reference (mirrors the PyTorch code) for sanity checking.
# ----------------------------------------------------------------------------
def multi_head_attention_ref(query, key, value, w_q_t, w_k_t, w_v_t, w_o_t, M):
    B, S, D = query.shape
    d_k = D // M

    def project(x, w_t):
        return (x.reshape(B * S, D) @ w_t).reshape(B, S, M, d_k).transpose(0, 2, 1, 3)

    q, k, v = project(query, w_q_t), project(key, w_k_t), project(value, w_v_t)
    scores = jnp.einsum("bmqd,bmkd->bmqk", q, k) / math.sqrt(d_k)
    p = jax.nn.softmax(scores, axis=-1)
    ctx = jnp.einsum("bmqk,bmkd->bmqd", p, v)
    ctx = ctx.transpose(0, 2, 1, 3).reshape(B * S, D)
    return (ctx @ w_o_t).reshape(B, S, D)


if __name__ == "__main__":
    key0 = jax.random.PRNGKey(0)
    B, S, d_model, M = 2, 8, 32, 4   # d_model % M == 0, d_k = 8

    ks = jax.random.split(key0, 7)
    bound = 1.0 / math.sqrt(d_model)  # nn.Linear default init range
    # Weights stored already-transposed: shape (in, out) == (d_model, d_model).
    w_q_t = jax.random.uniform(ks[0], (d_model, d_model), jnp.float32, -bound, bound)
    w_k_t = jax.random.uniform(ks[1], (d_model, d_model), jnp.float32, -bound, bound)
    w_v_t = jax.random.uniform(ks[2], (d_model, d_model), jnp.float32, -bound, bound)
    w_o_t = jax.random.uniform(ks[3], (d_model, d_model), jnp.float32, -bound, bound)

    query = jax.random.normal(ks[4], (B, S, d_model), jnp.float32)
    keyin = jax.random.normal(ks[5], (B, S, d_model), jnp.float32)
    value = jax.random.normal(ks[6], (B, S, d_model), jnp.float32)

    # ---- general (cross-attention) path, f32 MXU operands ------------------
    ref = multi_head_attention_ref(query, keyin, value,
                                   w_q_t, w_k_t, w_v_t, w_o_t, M)
    out = multi_head_attention(query, keyin, value,
                               w_q_t, w_k_t, w_v_t, w_o_t, M)
    out = jax.block_until_ready(out)
    assert out.shape == (B, S, d_model)
    assert jnp.allclose(out, ref, atol=2e-3, rtol=2e-3), "f32 path mismatch"

    # ---- bf16-operand / f32-accumulate path (v6e/v7x MXU fast path) --------
    out_bf16 = multi_head_attention(query, keyin, value,
                                    w_q_t, w_k_t, w_v_t, w_o_t, M,
                                    compute_dtype=jnp.bfloat16)
    out_bf16 = jax.block_until_ready(out_bf16)
    assert jnp.allclose(out_bf16, ref, atol=5e-2, rtol=5e-2), "bf16 path mismatch"

    # ---- self-attention fast path (query is key is value) ------------------
    ref_self = multi_head_attention_ref(query, query, query,
                                        w_q_t, w_k_t, w_v_t, w_o_t, M)
    out_self = multi_head_attention(query, query, query,
                                    w_q_t, w_k_t, w_v_t, w_o_t, M)
    out_self = jax.block_until_ready(out_self)
    assert jnp.allclose(out_self, ref_self, atol=2e-3, rtol=2e-3), \
        "self-attention fast path mismatch"

    print("KERNEL_OK")
</pallas_src>

<mosaic_0001>
module attributes {stable_mosaic.version = 11 : i64} {
  func.func @_mha_kernel(%arg0: i32, %arg1: i32, %arg2: memref<1x8x32xf32, #tpu.memory_space<vmem>>, %arg3: memref<1x8x32xf32, #tpu.memory_space<vmem>>, %arg4: memref<1x8x32xf32, #tpu.memory_space<vmem>>, %arg5: memref<32x32xf32, #tpu.memory_space<vmem>>, %arg6: memref<32x32xf32, #tpu.memory_space<vmem>>, %arg7: memref<32x32xf32, #tpu.memory_space<vmem>>, %arg8: memref<32x32xf32, #tpu.memory_space<vmem>>, %arg9: memref<1x8x32xf32, #tpu.memory_space<vmem>>, %arg10: memref<8x32xf32, #tpu.memory_space<vmem>>, %arg11: memref<8x32xf32, #tpu.memory_space<vmem>>, %arg12: memref<8x32xf32, #tpu.memory_space<vmem>>, %arg13: memref<8x32xf32, #tpu.memory_space<vmem>>) attributes {dimension_semantics = [#tpu.dimension_semantics<parallel>, #tpu.dimension_semantics<arbitrary>], iteration_bounds = array<i64: 2, 1>, scalar_prefetch = 0 : i64, scratch_operands = 4 : i64, tpu.core_type = #tpu.core_type<tc>, window_params = [{transform_indices = @transform_0, window_bounds = array<i64: 1, 8, 32>}, {transform_indices = @transform_1, window_bounds = array<i64: 1, 8, 32>}, {transform_indices = @transform_2, window_bounds = array<i64: 1, 8, 32>}, {pipeline_mode = #tpu.pipeline_mode<synchronous>, transform_indices = @transform_3, window_bounds = array<i64: 32, 32>}, {pipeline_mode = #tpu.pipeline_mode<synchronous>, transform_indices = @transform_4, window_bounds = array<i64: 32, 32>}, {pipeline_mode = #tpu.pipeline_mode<synchronous>, transform_indices = @transform_5, window_bounds = array<i64: 32, 32>}, {pipeline_mode = #tpu.pipeline_mode<synchronous>, transform_indices = @transform_6, window_bounds = array<i64: 32, 32>}, {transform_indices = @transform_7, window_bounds = array<i64: 1, 8, 32>}]} {
    %c0_i32 = arith.constant 0 : i32
    %0 = arith.cmpi eq, %arg1, %c0_i32 : i32
    %1 = arith.extui %0 : i1 to i32
    %c0_i32_0 = arith.constant 0 : i32
    %2 = arith.cmpi ne, %1, %c0_i32_0 : i32
    scf.if %2 {
      %c0_64 = arith.constant 0 : index
      %c0_65 = arith.constant 0 : index
      %c0_66 = arith.constant 0 : index
      %86 = vector.load %arg3[%c0_64, %c0_65, %c0_66] : memref<1x8x32xf32, #tpu.memory_space<vmem>>, vector<1x8x32xf32>
      %87 = vector.shape_cast %86 : vector<1x8x32xf32> to vector<8x32xf32>
      %c0_67 = arith.constant 0 : index
      %c0_68 = arith.constant 0 : index
      %88 = vector.load %arg6[%c0_67, %c0_68] : memref<32x32xf32, #tpu.memory_space<vmem>>, vector<32x32xf32>
      %cst_69 = arith.constant dense<0.000000e+00> : vector<8x32xf32>
      %89 = tpu.matmul %87, %88, %cst_69 {dimension_numbers = #tpu.dot_dimension_numbers<[1], [0], [0], [1], [0, 0, 1, 1], [], []>} : vector<8x32xf32>, vector<32x32xf32>, vector<8x32xf32> -> vector<8x32xf32>
      %c0_70 = arith.constant 0 : index
      %c0_71 = arith.constant 0 : index
      %90 = vector.load %arg11[%c0_70, %c0_71] : memref<8x32xf32, #tpu.memory_space<vmem>>, vector<8x32xf32>
      tpu.vector_store %arg11[%c0_70, %c0_71], %89 {strides = array<i32>} : memref<8x32xf32, #tpu.memory_space<vmem>>, vector<8x32xf32>,
      %c0_72 = arith.constant 0 : index
      %c0_73 = arith.constant 0 : index
      %c0_74 = arith.constant 0 : index
      %91 = vector.load %arg4[%c0_72, %c0_73, %c0_74] : memref<1x8x32xf32, #tpu.memory_space<vmem>>, vector<1x8x32xf32>
      %92 = vector.shape_cast %91 : vector<1x8x32xf32> to vector<8x32xf32>
      %c0_75 = arith.constant 0 : index
      %c0_76 = arith.constant 0 : index
      %93 = vector.load %arg7[%c0_75, %c0_76] : memref<32x32xf32, #tpu.memory_space<vmem>>, vector<32x32xf32>
      %cst_77 = arith.constant dense<0.000000e+00> : vector<8x32xf32>
      %94 = tpu.matmul %92, %93, %cst_77 {dimension_numbers = #tpu.dot_dimension_numbers<[1], [0], [0], [1], [0, 0, 1, 1], [], []>} : vector<8x32xf32>, vector<32x32xf32>, vector<8x32xf32> -> vector<8x32xf32>
      %c0_78 = arith.constant 0 : index
      %c0_79 = arith.constant 0 : index
      %95 = vector.load %arg12[%c0_78, %c0_79] : memref<8x32xf32, #tpu.memory_space<vmem>>, vector<8x32xf32>
      tpu.vector_store %arg12[%c0_78, %c0_79], %94 {strides = array<i32>} : memref<8x32xf32, #tpu.memory_space<vmem>>, vector<8x32xf32>,
    } else {
    }
    %c0 = arith.constant 0 : index
    %c0_1 = arith.constant 0 : index
    %c0_2 = arith.constant 0 : index
    %3 = vector.load %arg2[%c0, %c0_1, %c0_2] : memref<1x8x32xf32, #tpu.memory_space<vmem>>, vector<1x8x32xf32>
    %4 = vector.shape_cast %3 : vector<1x8x32xf32> to vector<8x32xf32>
    %c0_3 = arith.constant 0 : index
    %c0_4 = arith.constant 0 : index
    %5 = vector.load %arg5[%c0_3, %c0_4] : memref<32x32xf32, #tpu.memory_space<vmem>>, vector<32x32xf32>
    %cst = arith.constant dense<0.000000e+00> : vector<8x32xf32>
    %6 = tpu.matmul %4, %5, %cst {dimension_numbers = #tpu.dot_dimension_numbers<[1], [0], [0], [1], [0, 0, 1, 1], [], []>} : vector<8x32xf32>, vector<32x32xf32>, vector<8x32xf32> -> vector<8x32xf32>
    %c0_5 = arith.constant 0 : index
    %c0_6 = arith.constant 0 : index
    %7 = vector.load %arg10[%c0_5, %c0_6] : memref<8x32xf32, #tpu.memory_space<vmem>>, vector<8x32xf32>
    tpu.vector_store %arg10[%c0_5, %c0_6], %6 {strides = array<i32>} : memref<8x32xf32, #tpu.memory_space<vmem>>, vector<8x32xf32>,
    %c0_7 = arith.constant 0 : index
    %c0_8 = arith.constant 0 : index
    %8 = vector.load %arg10[%c0_7, %c0_8] : memref<8x32xf32, #tpu.memory_space<vmem>>, vector<8x8xf32>
    %c0_9 = arith.constant 0 : index
    %c0_10 = arith.constant 0 : index
    %9 = vector.load %arg11[%c0_9, %c0_10] : memref<8x32xf32, #tpu.memory_space<vmem>>, vector<8x8xf32>
    %c0_11 = arith.constant 0 : index
    %c0_12 = arith.constant 0 : index
    %10 = vector.load %arg12[%c0_11, %c0_12] : memref<8x32xf32, #tpu.memory_space<vmem>>, vector<8x8xf32>
    %cst_13 = arith.constant dense<0.000000e+00> : vector<8x8xf32>
    %11 = tpu.matmul %8, %9, %cst_13 {dimension_numbers = #tpu.dot_dimension_numbers<[1], [1], [0], [0], [0, 0, 1, 0], [], []>} : vector<8x8xf32>, vector<8x8xf32>, vector<8x8xf32> -> vector<8x8xf32>
    %cst_14 = arith.constant 0.353553385 : f32
    %12 = vector.broadcast %cst_14 : f32 to vector<8x8xf32>
    %13 = arith.mulf %11, %12 : vector<8x8xf32>
    %cst_15 = arith.constant dense<0xFF800000> : vector<8xf32>
    %14 = vector.multi_reduction <maximumf>, %13, %cst_15 [1] : vector<8x8xf32> to vector<8xf32>
    %15 = vector.shape_cast %14 : vector<8xf32> to vector<8x1xf32>
    %16 = vector.broadcast %15 : vector<8x1xf32> to vector<8x8xf32>
    %17 = arith.subf %13, %16 : vector<8x8xf32>
    %18 = math.exp %17 : vector<8x8xf32>
    %cst_16 = arith.constant dense<0.000000e+00> : vector<8xf32>
    %19 = vector.multi_reduction <add>, %18, %cst_16 [1] : vector<8x8xf32> to vector<8xf32>
    %20 = vector.shape_cast %19 : vector<8xf32> to vector<8x1xf32>
    %21 = tpu.reciprocal %20 {approx = true} : vector<8x1xf32> -> vector<8x1xf32>
    %22 = vector.broadcast %21 : vector<8x1xf32> to vector<8x8xf32>
    %23 = arith.mulf %18, %22 : vector<8x8xf32>
    %cst_17 = arith.constant dense<0.000000e+00> : vector<8x8xf32>
    %24 = tpu.matmul %23, %10, %cst_17 {dimension_numbers = #tpu.dot_dimension_numbers<[1], [0], [0], [1], [0, 0, 1, 1], [], []>} : vector<8x8xf32>, vector<8x8xf32>, vector<8x8xf32> -> vector<8x8xf32>
    %c0_18 = arith.constant 0 : index
    %c0_19 = arith.constant 0 : index
    %25 = vector.load %arg13[%c0_18, %c0_19] : memref<8x32xf32, #tpu.memory_space<vmem>>, vector<8x8xf32>
    tpu.vector_store %arg13[%c0_18, %c0_19], %24 {strides = array<i32>} : memref<8x32xf32, #tpu.memory_space<vmem>>, vector<8x8xf32>,
    %c0_20 = arith.constant 0 : index
    %c8 = arith.constant 8 : index
    %26 = vector.load %arg10[%c0_20, %c8] : memref<8x32xf32, #tpu.memory_space<vmem>>, vector<8x8xf32>
    %c0_21 = arith.constant 0 : index
    %c8_22 = arith.constant 8 : index
    %27 = vector.load %arg11[%c0_21, %c8_22] : memref<8x32xf32, #tpu.memory_space<vmem>>, vector<8x8xf32>
    %c0_23 = arith.constant 0 : index
    %c8_24 = arith.constant 8 : index
    %28 = vector.load %arg12[%c0_23, %c8_24] : memref<8x32xf32, #tpu.memory_space<vmem>>, vector<8x8xf32>
    %cst_25 = arith.constant dense<0.000000e+00> : vector<8x8xf32>
    %29 = tpu.matmul %26, %27, %cst_25 {dimension_numbers = #tpu.dot_dimension_numbers<[1], [1], [0], [0], [0, 0, 1, 0], [], []>} : vector<8x8xf32>, vector<8x8xf32>, vector<8x8xf32> -> vector<8x8xf32>
    %cst_26 = arith.constant 0.353553385 : f32
    %30 = vector.broadcast %cst_26 : f32 to vector<8x8xf32>
    %31 = arith.mulf %29, %30 : vector<8x8xf32>
    %cst_27 = arith.constant dense<0xFF800000> : vector<8xf32>
    %32 = vector.multi_reduction <maximumf>, %31, %cst_27 [1] : vector<8x8xf32> to vector<8xf32>
    %33 = vector.shape_cast %32 : vector<8xf32> to vector<8x1xf32>
    %34 = vector.broadcast %33 : vector<8x1xf32> to vector<8x8xf32>
    %35 = arith.subf %31, %34 : vector<8x8xf32>
    %36 = math.exp %35 : vector<8x8xf32>
    %cst_28 = arith.constant dense<0.000000e+00> : vector<8xf32>
    %37 = vector.multi_reduction <add>, %36, %cst_28 [1] : vector<8x8xf32> to vector<8xf32>
    %38 = vector.shape_cast %37 : vector<8xf32> to vector<8x1xf32>
    %39 = tpu.reciprocal %38 {approx = true} : vector<8x1xf32> -> vector<8x1xf32>
    %40 = vector.broadcast %39 : vector<8x1xf32> to vector<8x8xf32>
    %41 = arith.mulf %36, %40 : vector<8x8xf32>
    %cst_29 = arith.constant dense<0.000000e+00> : vector<8x8xf32>
    %42 = tpu.matmul %41, %28, %cst_29 {dimension_numbers = #tpu.dot_dimension_numbers<[1], [0], [0], [1], [0, 0, 1, 1], [], []>} : vector<8x8xf32>, vector<8x8xf32>, vector<8x8xf32> -> vector<8x8xf32>
    %c0_30 = arith.constant 0 : index
    %c8_31 = arith.constant 8 : index
    %43 = vector.load %arg13[%c0_30, %c8_31] : memref<8x32xf32, #tpu.memory_space<vmem>>, vector<8x8xf32>
    tpu.vector_store %arg13[%c0_30, %c8_31], %42 {strides = array<i32>} : memref<8x32xf32, #tpu.memory_space<vmem>>, vector<8x8xf32>,
    %c0_32 = arith.constant 0 : index
    %c16 = arith.constant 16 : index
    %44 = vector.load %arg10[%c0_32, %c16] : memref<8x32xf32, #tpu.memory_space<vmem>>, vector<8x8xf32>
    %c0_33 = arith.constant 0 : index
    %c16_34 = arith.constant 16 : index
    %45 = vector.load %arg11[%c0_33, %c16_34] : memref<8x32xf32, #tpu.memory_space<vmem>>, vector<8x8xf32>
    %c0_35 = arith.constant 0 : index
    %c16_36 = arith.constant 16 : index
    %46 = vector.load %arg12[%c0_35, %c16_36] : memref<8x32xf32, #tpu.memory_space<vmem>>, vector<8x8xf32>
    %cst_37 = arith.constant dense<0.000000e+00> : vector<8x8xf32>
    %47 = tpu.matmul %44, %45, %cst_37 {dimension_numbers = #tpu.dot_dimension_numbers<[1], [1], [0], [0], [0, 0, 1, 0], [], []>} : vector<8x8xf32>, vector<8x8xf32>, vector<8x8xf32> -> vector<8x8xf32>
    %cst_38 = arith.constant 0.353553385 : f32
    %48 = vector.broadcast %cst_38 : f32 to vector<8x8xf32>
    %49 = arith.mulf %47, %48 : vector<8x8xf32>
    %cst_39 = arith.constant dense<0xFF800000> : vector<8xf32>
    %50 = vector.multi_reduction <maximumf>, %49, %cst_39 [1] : vector<8x8xf32> to vector<8xf32>
    %51 = vector.shape_cast %50 : vector<8xf32> to vector<8x1xf32>
    %52 = vector.broadcast %51 : vector<8x1xf32> to vector<8x8xf32>
    %53 = arith.subf %49, %52 : vector<8x8xf32>
    %54 = math.exp %53 : vector<8x8xf32>
    %cst_40 = arith.constant dense<0.000000e+00> : vector<8xf32>
    %55 = vector.multi_reduction <add>, %54, %cst_40 [1] : vector<8x8xf32> to vector<8xf32>
    %56 = vector.shape_cast %55 : vector<8xf32> to vector<8x1xf32>
    %57 = tpu.reciprocal %56 {approx = true} : vector<8x1xf32> -> vector<8x1xf32>
    %58 = vector.broadcast %57 : vector<8x1xf32> to vector<8x8xf32>
    %59 = arith.mulf %54, %58 : vector<8x8xf32>
    %cst_41 = arith.constant dense<0.000000e+00> : vector<8x8xf32>
    %60 = tpu.matmul %59, %46, %cst_41 {dimension_numbers = #tpu.dot_dimension_numbers<[1], [0], [0], [1], [0, 0, 1, 1], [], []>} : vector<8x8xf32>, vector<8x8xf32>, vector<8x8xf32> -> vector<8x8xf32>
    %c0_42 = arith.constant 0 : index
    %c16_43 = arith.constant 16 : index
    %61 = vector.load %arg13[%c0_42, %c16_43] : memref<8x32xf32, #tpu.memory_space<vmem>>, vector<8x8xf32>
    tpu.vector_store %arg13[%c0_42, %c16_43], %60 {strides = array<i32>} : memref<8x32xf32, #tpu.memory_space<vmem>>, vector<8x8xf32>,
    %c0_44 = arith.constant 0 : index
    %c24 = arith.constant 24 : index
    %62 = vector.load %arg10[%c0_44, %c24] : memref<8x32xf32, #tpu.memory_space<vmem>>, vector<8x8xf32>
    %c0_45 = arith.constant 0 : index
    %c24_46 = arith.constant 24 : index
    %63 = vector.load %arg11[%c0_45, %c24_46] : memref<8x32xf32, #tpu.memory_space<vmem>>, vector<8x8xf32>
    %c0_47 = arith.constant 0 : index
    %c24_48 = arith.constant 24 : index
    %64 = vector.load %arg12[%c0_47, %c24_48] : memref<8x32xf32, #tpu.memory_space<vmem>>, vector<8x8xf32>
    %cst_49 = arith.constant dense<0.000000e+00> : vector<8x8xf32>
    %65 = tpu.matmul %62, %63, %cst_49 {dimension_numbers = #tpu.dot_dimension_numbers<[1], [1], [0], [0], [0, 0, 1, 0], [], []>} : vector<8x8xf32>, vector<8x8xf32>, vector<8x8xf32> -> vector<8x8xf32>
    %cst_50 = arith.constant 0.353553385 : f32
    %66 = vector.broadcast %cst_50 : f32 to vector<8x8xf32>
    %67 = arith.mulf %65, %66 : vector<8x8xf32>
    %cst_51 = arith.constant dense<0xFF800000> : vector<8xf32>
    %68 = vector.multi_reduction <maximumf>, %67, %cst_51 [1] : vector<8x8xf32> to vector<8xf32>
    %69 = vector.shape_cast %68 : vector<8xf32> to vector<8x1xf32>
    %70 = vector.broadcast %69 : vector<8x1xf32> to vector<8x8xf32>
    %71 = arith.subf %67, %70 : vector<8x8xf32>
    %72 = math.exp %71 : vector<8x8xf32>
    %cst_52 = arith.constant dense<0.000000e+00> : vector<8xf32>
    %73 = vector.multi_reduction <add>, %72, %cst_52 [1] : vector<8x8xf32> to vector<8xf32>
    %74 = vector.shape_cast %73 : vector<8xf32> to vector<8x1xf32>
    %75 = tpu.reciprocal %74 {approx = true} : vector<8x1xf32> -> vector<8x1xf32>
    %76 = vector.broadcast %75 : vector<8x1xf32> to vector<8x8xf32>
    %77 = arith.mulf %72, %76 : vector<8x8xf32>
    %cst_53 = arith.constant dense<0.000000e+00> : vector<8x8xf32>
    %78 = tpu.matmul %77, %64, %cst_53 {dimension_numbers = #tpu.dot_dimension_numbers<[1], [0], [0], [1], [0, 0, 1, 1], [], []>} : vector<8x8xf32>, vector<8x8xf32>, vector<8x8xf32> -> vector<8x8xf32>
    %c0_54 = arith.constant 0 : index
    %c24_55 = arith.constant 24 : index
    %79 = vector.load %arg13[%c0_54, %c24_55] : memref<8x32xf32, #tpu.memory_space<vmem>>, vector<8x8xf32>
    tpu.vector_store %arg13[%c0_54, %c24_55], %78 {strides = array<i32>} : memref<8x32xf32, #tpu.memory_space<vmem>>, vector<8x8xf32>,
    %c0_56 = arith.constant 0 : index
    %c0_57 = arith.constant 0 : index
    %80 = vector.load %arg13[%c0_56, %c0_57] : memref<8x32xf32, #tpu.memory_space<vmem>>, vector<8x32xf32>
    %c0_58 = arith.constant 0 : index
    %c0_59 = arith.constant 0 : index
    %81 = vector.load %arg8[%c0_58, %c0_59] : memref<32x32xf32, #tpu.memory_space<vmem>>, vector<32x32xf32>
    %cst_60 = arith.constant dense<0.000000e+00> : vector<8x32xf32>
    %82 = tpu.matmul %80, %81, %cst_60 {dimension_numbers = #tpu.dot_dimension_numbers<[1], [0], [0], [1], [0, 0, 1, 1], [], []>} : vector<8x32xf32>, vector<32x32xf32>, vector<8x32xf32> -> vector<8x32xf32>
    %c0_61 = arith.constant 0 : index
    %c0_62 = arith.constant 0 : index
    %c0_63 = arith.constant 0 : index
    %83 = vector.load %arg9[%c0_61, %c0_62, %c0_63] : memref<1x8x32xf32, #tpu.memory_space<vmem>>, vector<1x8x32xf32>
    %84 = vector.shape_cast %83 : vector<1x8x32xf32> to vector<8x32xf32>
    %85 = vector.shape_cast %82 : vector<8x32xf32> to vector<1x8x32xf32>
    tpu.vector_store %arg9[%c0_61, %c0_62, %c0_63], %85 {strides = array<i32>} : memref<1x8x32xf32, #tpu.memory_space<vmem>>, vector<1x8x32xf32>,
    return
  }
  func.func @transform_0(%arg0: i32, %arg1: i32) -> (i32, i32, i32) {
    %c0_i32 = arith.constant 0 : i32
    %c0_i32_0 = arith.constant 0 : i32
    return %arg0, %arg1, %c0_i32 : i32, i32, i32
  }
  func.func @transform_1(%arg0: i32, %arg1: i32) -> (i32, i32, i32) {
    %c0_i32 = arith.constant 0 : i32
    %c0_i32_0 = arith.constant 0 : i32
    %c0_i32_1 = arith.constant 0 : i32
    return %arg0, %c0_i32, %c0_i32_0 : i32, i32, i32
  }
  func.func @transform_2(%arg0: i32, %arg1: i32) -> (i32, i32, i32) {
    %c0_i32 = arith.constant 0 : i32
    %c0_i32_0 = arith.constant 0 : i32
    %c0_i32_1 = arith.constant 0 : i32
    return %arg0, %c0_i32, %c0_i32_0 : i32, i32, i32
  }
  func.func @transform_3(%arg0: i32, %arg1: i32) -> (i32, i32) {
    %c0_i32 = arith.constant 0 : i32
    %c0_i32_0 = arith.constant 0 : i32
    %c0_i32_1 = arith.constant 0 : i32
    return %c0_i32, %c0_i32_0 : i32, i32
  }
  func.func @transform_4(%arg0: i32, %arg1: i32) -> (i32, i32) {
    %c0_i32 = arith.constant 0 : i32
    %c0_i32_0 = arith.constant 0 : i32
    %c0_i32_1 = arith.constant 0 : i32
    return %c0_i32, %c0_i32_0 : i32, i32
  }
  func.func @transform_5(%arg0: i32, %arg1: i32) -> (i32, i32) {
    %c0_i32 = arith.constant 0 : i32
    %c0_i32_0 = arith.constant 0 : i32
    %c0_i32_1 = arith.constant 0 : i32
    return %c0_i32, %c0_i32_0 : i32, i32
  }
  func.func @transform_6(%arg0: i32, %arg1: i32) -> (i32, i32) {
    %c0_i32 = arith.constant 0 : i32
    %c0_i32_0 = arith.constant 0 : i32
    %c0_i32_1 = arith.constant 0 : i32
    return %c0_i32, %c0_i32_0 : i32, i32
  }
  func.func @transform_7(%arg0: i32, %arg1: i32) -> (i32, i32, i32) {
    %c0_i32 = arith.constant 0 : i32
    %c0_i32_0 = arith.constant 0 : i32
    return %arg0, %arg1, %c0_i32 : i32, i32, i32
  }
}

</mosaic_0001>

<llo_original>
// kernel: tpu_custom_call.1
$region0: #{tpu_custom_call.1}
  #allocation0 [shape = 'u32[]', space=smem, size = 0x4, offset = 0x4, fixed_abs, tag = 'smem constant byte address 0x4 - core index']
  #allocation1 [shape = 'u32[72,128]{1,0:T(1,128)}', space=vmem, size = 0x9000, scoped, tag = 'internal scratch']
  #allocation2 [shape = 'f32[8,32]{1,0:T(8,128)}', space=vmem, size = 0x1000, scoped, tag = 'scratch operand']
  #allocation3 [shape = 'f32[8,32]{1,0:T(8,128)}', space=vmem, size = 0x1000, scoped, tag = 'scratch operand']
  #allocation4 [shape = 'f32[8,32]{1,0:T(8,128)}', space=vmem, size = 0x1000, scoped, tag = 'scratch operand']
  #allocation5 [shape = 'f32[8,32]{1,0:T(8,128)}', space=vmem, size = 0x1000, scoped, tag = 'scratch operand']
  %s0 = inlined_call_operand.hbm [shape: f32[2,8,32], index: 0, kind: input, shape index: {}]
  %s1 = inlined_call_operand.hbm [shape: f32[2,8,32], index: 1, kind: input, shape index: {}]
  %s2 = inlined_call_operand.hbm [shape: f32[2,8,32], index: 2, kind: input, shape index: {}]
  %s3 = inlined_call_operand.hbm [shape: f32[32,32], index: 3, kind: input, shape index: {}]
  %s4 = inlined_call_operand.hbm [shape: f32[32,32], index: 4, kind: input, shape index: {}]
  %s5 = inlined_call_operand.hbm [shape: f32[32,32], index: 5, kind: input, shape index: {}]
  %s6 = inlined_call_operand.hbm [shape: f32[32,32], index: 6, kind: input, shape index: {}]
  %s7 = inlined_call_operand.hbm [shape: f32[2,8,32], index: 7, kind: output, shape index: {}]
  %s8 = sld [smem:[#allocation0]]
  $region93: #{tpu_custom_call.1} parent=0
    _
  %s10 = ssub.s32 1, %s8
  %s11 = scalar_select 0, %s10, %s8
  $region1: #{tpu_custom_call.1} parent=0
    #allocation6 [shape = 'u8[8192]{0}', space=vmem, size = 0x2000, scoped, tag = 'input window, operand 0']
    #allocation7 [shape = 's32[2]{0}', space=sflag, size = 0x8, scoped, tag = 'scoped memory for tpu_custom_call.1']
    #allocation8 [shape = 's32[2]{0}', space=sflag, size = 0x8, scoped, tag = 'scoped memory for tpu_custom_call.1']
    #allocation9 [shape = 'u8[8192]{0}', space=vmem, size = 0x2000, scoped, tag = 'input window, operand 1']
    #allocation10 [shape = 's32[2]{0}', space=sflag, size = 0x8, scoped, tag = 'scoped memory for tpu_custom_call.1']
    #allocation11 [shape = 'u8[8192]{0}', space=vmem, size = 0x2000, scoped, tag = 'input window, operand 2']
    #allocation12 [shape = 'u8[16384]{0}', space=vmem, size = 0x4000, scoped, tag = 'input window, operand 3, single buffered']
    #allocation13 [shape = 's32[1]{0}', space=sflag, size = 0x4, scoped, tag = 'scoped memory for tpu_custom_call.1']
    #allocation14 [shape = 'u8[16384]{0}', space=vmem, size = 0x4000, scoped, tag = 'input window, operand 4, single buffered']
    #allocation15 [shape = 'u8[16384]{0}', space=vmem, size = 0x4000, scoped, tag = 'input window, operand 5, single buffered']
    #allocation16 [shape = 's32[1]{0}', space=sflag, size = 0x4, scoped, tag = 'scoped memory for tpu_custom_call.1']
    #allocation17 [shape = 'u8[16384]{0}', space=vmem, size = 0x4000, scoped, tag = 'input window, operand 6, single buffered']
    #allocation18 [shape = 'u8[8192]{0}', space=vmem, size = 0x2000, scoped, tag = 'output window, operand 0']
    %12 = vsyncpa [#allocation7], 0
    %s13 = scalar_lea.sflag [#allocation7], 1
    %14 = vsyncpa %s13, 0
    %15 = vsyncpa [#allocation10], 0
    %s16 = scalar_lea.sflag [#allocation10], 1
    %17 = vsyncpa %s16, 0
    %18 = vsyncpa [#allocation13], 0
    %19 = vsyncpa [#allocation16], 0
    %20 = vsyncpa [#allocation8], 0
    %s21 = scalar_lea.sflag [#allocation8], 1
    %22 = vsyncpa %s21, 0
    loop: start=0, step=1, limit=4
    $region2: #{tpu_custom_call.1} parent=1 // loop_pre_header
      _
    $region3: #{tpu_custom_call.1} parent=1 // loop_header
      %s24 = sphi 0, %s28
      %p25 = scmp.ge.s32.totalorder %s24, 4
      %s31 = sphi 0, %s43
      %s32 = sphi 0, %s39
      %s33 = sphi 0, %s31
      %s34 = sphi 0, %s32
      %s35 = sphi 0, %s33
      %s36 = sphi 0, %s34
      %s48 = sphi 0, %s50
      %s51 = sphi 0, %s48
      %s52 = sphi 0, %s51
      %s68 = sphi 0, %s52
      %s74 = sphi 0, %s76
      %s77 = sphi 0, %s74
      %s78 = sphi 0, %s77
      %s94 = sphi 0, %s78
      %s100 = sphi 0, %s102
      %s103 = sphi 0, %s100
      %s104 = sphi 0, %s103
      %s120 = sphi 0, %s104
      %s124 = sphi 0, %s124
      %s126 = sphi 0, %s124
      %s127 = sphi 0, %s126
      %s141 = sphi 0, %s127
      %s145 = sphi 0, %s145
      %s147 = sphi 0, %s145
      %s148 = sphi 0, %s147
      %s162 = sphi 0, %s148
      %s166 = sphi 0, %s166
      %s168 = sphi 0, %s166
      %s169 = sphi 0, %s168
      %s183 = sphi 0, %s169
      %s187 = sphi 0, %s187
      %s189 = sphi 0, %s187
      %s190 = sphi 0, %s189
      %s204 = sphi 0, %s190
      %s212 = sphi 0, %s214
      %s215 = sphi 0, %s212
      %s216 = sphi 0, %s215
      %s232 = sphi 0, %s216
    $region4: #{tpu_custom_call.1} parent=1 // loop_header_branch
      %27 = sbr.rel (%p25) target = $region8
    $region5: #{tpu_custom_call.1} parent=1 // loop_body
      %s29 = ssub.s32 %s24, 1
      %s30 = ssub.s32 %s24, 2
      %s37 = sadd.s32 1, %s32
      %p38 = scmp.ge.s32.totalorder %s37, 1
      %s39 = scalar_select %p38, 0, %s37
      %s40 = sadd.s32 1, %s31
      %s41 = scalar_select %p38, %s40, %s31
      %p42 = scmp.ge.s32.totalorder %s41, 2
      %s43 = scalar_select %p42, 0, %s41
      %s44 = ssub.s32 %s31, %s43
      %s45 = ssub.s32 %s32, %s39
      %s46 = sor.u32 %s44, %s45
      %p47 = scmp.eq.s32.totalorder %s46, 0
      %s49 = sadd.s32 %s48, 1
      %s50 = scalar_select %p47, %s48, %s49
      %p53 = pneg %p47
      %p54 = scmp.eq.s32.totalorder %s24, 1
      %p55 = por %p53, %p54
      %p56 = scmp.ne.s32.totalorder %s48, %s51
      %p57 = scmp.eq.s32.totalorder %s24, 0
      %p58 = por %p56, %p57
      %p59 = scmp.ne.s32.totalorder %s48, %s51
      %p60 = scmp.eq.s32.totalorder %s29, 1
      %p61 = por %p59, %p60
      %p62 = scmp.ne.s32.totalorder %s51, %s52
      %p63 = scmp.eq.s32.totalorder %s29, 0
      %p64 = por %p62, %p63
      %p65 = scmp.ne.s32.totalorder %s51, %s52
      %p66 = scmp.eq.s32.totalorder %s30, 1
      %p67 = por %p65, %p66
      %p69 = scmp.ne.s32.totalorder %s52, %s68
      %p70 = scmp.eq.s32.totalorder %s30, 0
      %p71 = por %p69, %p70
      %s72 = ssub.s32 %s31, %s43
      %p73 = scmp.eq.s32.totalorder %s72, 0
      %s75 = sadd.s32 %s74, 1
      %s76 = scalar_select %p73, %s74, %s75
      %p79 = pneg %p73
      %p80 = scmp.eq.s32.totalorder %s24, 1
      %p81 = por %p79, %p80
      %p82 = scmp.ne.s32.totalorder %s74, %s77
      %p83 = scmp.eq.s32.totalorder %s24, 0
      %p84 = por %p82, %p83
      %p85 = scmp.ne.s32.totalorder %s74, %s77
      %p86 = scmp.eq.s32.totalorder %s29, 1
      %p87 = por %p85, %p86
      %p88 = scmp.ne.s32.totalorder %s77, %s78
      %p89 = scmp.eq.s32.totalorder %s29, 0
      %p90 = por %p88, %p89
      %p91 = scmp.ne.s32.totalorder %s77, %s78
      %p92 = scmp.eq.s32.totalorder %s30, 1
      %p93 = por %p91, %p92
      %p95 = scmp.ne.s32.totalorder %s78, %s94
      %p96 = scmp.eq.s32.totalorder %s30, 0
      %p97 = por %p95, %p96
      %s98 = ssub.s32 %s31, %s43
      %p99 = scmp.eq.s32.totalorder %s98, 0
      %s101 = sadd.s32 %s100, 1
      %s102 = scalar_select %p99, %s100, %s101
      %p105 = pneg %p99
      %p106 = scmp.eq.s32.totalorder %s24, 1
      %p107 = por %p105, %p106
      %p108 = scmp.ne.s32.totalorder %s100, %s103
      %p109 = scmp.eq.s32.totalorder %s24, 0
      %p110 = por %p108, %p109
      %p111 = scmp.ne.s32.totalorder %s100, %s103
      %p112 = scmp.eq.s32.totalorder %s29, 1
      %p113 = por %p111, %p112
      %p114 = scmp.ne.s32.totalorder %s103, %s104
      %p115 = scmp.eq.s32.totalorder %s29, 0
      %p116 = por %p114, %p115
      %p117 = scmp.ne.s32.totalorder %s103, %s104
      %p118 = scmp.eq.s32.totalorder %s30, 1
      %p119 = por %p117, %p118
      %p121 = scmp.ne.s32.totalorder %s104, %s120
      %p122 = scmp.eq.s32.totalorder %s30, 0
      %p123 = por %p121, %p122
      %s125 = sadd.s32 %s124, 1
      %p128 = scmp.eq.s32.totalorder %s24, 1
      %p129 = scmp.ne.s32.totalorder %s124, %s126
      %p130 = scmp.eq.s32.totalorder %s24, 0
      %p131 = por %p129, %p130
      %p132 = scmp.ne.s32.totalorder %s124, %s126
      %p133 = scmp.eq.s32.totalorder %s29, 1
      %p134 = por %p132, %p133
      %p135 = scmp.ne.s32.totalorder %s126, %s127
      %p136 = scmp.eq.s32.totalorder %s29, 0
      %p137 = por %p135, %p136
      %p138 = scmp.ne.s32.totalorder %s126, %s127
      %p139 = scmp.eq.s32.totalorder %s30, 1
      %p140 = por %p138, %p139
      %p142 = scmp.ne.s32.totalorder %s127, %s141
      %p143 = scmp.eq.s32.totalorder %s30, 0
      %p144 = por %p142, %p143
      %s146 = sadd.s32 %s145, 1
      %p149 = scmp.eq.s32.totalorder %s24, 1
      %p150 = scmp.ne.s32.totalorder %s145, %s147
      %p151 = scmp.eq.s32.totalorder %s24, 0
      %p152 = por %p150, %p151
      %p153 = scmp.ne.s32.totalorder %s145, %s147
      %p154 = scmp.eq.s32.totalorder %s29, 1
      %p155 = por %p153, %p154
      %p156 = scmp.ne.s32.totalorder %s147, %s148
      %p157 = scmp.eq.s32.totalorder %s29, 0
      %p158 = por %p156, %p157
      %p159 = scmp.ne.s32.totalorder %s147, %s148
      %p160 = scmp.eq.s32.totalorder %s30, 1
      %p161 = por %p159, %p160
      %p163 = scmp.ne.s32.totalorder %s148, %s162
      %p164 = scmp.eq.s32.totalorder %s30, 0
      %p165 = por %p163, %p164
      %s167 = sadd.s32 %s166, 1
      %p170 = scmp.eq.s32.totalorder %s24, 1
      %p171 = scmp.ne.s32.totalorder %s166, %s168
      %p172 = scmp.eq.s32.totalorder %s24, 0
      %p173 = por %p171, %p172
      %p174 = scmp.ne.s32.totalorder %s166, %s168
      %p175 = scmp.eq.s32.totalorder %s29, 1
      %p176 = por %p174, %p175
      %p177 = scmp.ne.s32.totalorder %s168, %s169
      %p178 = scmp.eq.s32.totalorder %s29, 0
      %p179 = por %p177, %p178
      %p180 = scmp.ne.s32.totalorder %s168, %s169
      %p181 = scmp.eq.s32.totalorder %s30, 1
      %p182 = por %p180, %p181
      %p184 = scmp.ne.s32.totalorder %s169, %s183
      %p185 = scmp.eq.s32.totalorder %s30, 0
      %p186 = por %p184, %p185
      %s188 = sadd.s32 %s187, 1
      %p191 = scmp.eq.s32.totalorder %s24, 1
      %p192 = scmp.ne.s32.totalorder %s187, %s189
      %p193 = scmp.eq.s32.totalorder %s24, 0
      %p194 = por %p192, %p193
      %p195 = scmp.ne.s32.totalorder %s187, %s189
      %p196 = scmp.eq.s32.totalorder %s29, 1
      %p197 = por %p195, %p196
      %p198 = scmp.ne.s32.totalorder %s189, %s190
      %p199 = scmp.eq.s32.totalorder %s29, 0
      %p200 = por %p198, %p199
      %p201 = scmp.ne.s32.totalorder %s189, %s190
      %p202 = scmp.eq.s32.totalorder %s30, 1
      %p203 = por %p201, %p202
      %p205 = scmp.ne.s32.totalorder %s190, %s204
      %p206 = scmp.eq.s32.totalorder %s30, 0
      %p207 = por %p205, %p206
      %s208 = ssub.s32 %s31, %s43
      %s209 = ssub.s32 %s32, %s39
      %s210 = sor.u32 %s208, %s209
      %p211 = scmp.eq.s32.totalorder %s210, 0
      %s213 = sadd.s32 %s212, 1
      %s214 = scalar_select %p211, %s212, %s213
      %p217 = pneg %p211
      %p218 = scmp.eq.s32.totalorder %s24, 1
      %p219 = por %p217, %p218
      %p220 = scmp.ne.s32.totalorder %s212, %s215
      %p221 = scmp.eq.s32.totalorder %s24, 0
      %p222 = por %p220, %p221
      %p223 = scmp.ne.s32.totalorder %s212, %s215
      %p224 = scmp.eq.s32.totalorder %s29, 1
      %p225 = por %p223, %p224
      %p226 = scmp.ne.s32.totalorder %s215, %s216
      %p227 = scmp.eq.s32.totalorder %s29, 0
      %p228 = por %p226, %p227
      %p229 = scmp.ne.s32.totalorder %s215, %s216
      %p230 = scmp.eq.s32.totalorder %s30, 1
      %p231 = por %p229, %p230
      %p233 = scmp.ne.s32.totalorder %s216, %s232
      %p234 = scmp.eq.s32.totalorder %s30, 0
      %p235 = por %p233, %p234
      %p236 = scmp.le.s32.totalorder 1, %s24
      %p237 = scmp.lt.s32.totalorder %s24, 3
      %p238 = pnand %p236, %p237
      %p239 = pneg %p238
      // Predicated region
      $region9: #{tpu_custom_call.1} parent=5 // pred_check
        _
      $region10: #{tpu_custom_call.1} parent=5 // pred_check_branch
        %241 = sbr.rel (%p238) target = $region12
      $region11: #{tpu_custom_call.1} parent=5 // pred_region
        %s242 = ssub.s32 %s24, 1
        // Predicated region
        $region13: #{tpu_custom_call.1} parent=11 // pred_check
          %p243 = pneg %p137
        $region14: #{tpu_custom_call.1} parent=11 // pred_check_branch
          %245 = sbr.rel (%p243) target = $region16
        $region15: #{tpu_custom_call.1} parent=11 // pred_region
          %247 = vsyncadd [#allocation13], 0
          %s248 = sshll.u32 %s3, 4
          %s249 = int_to_ptr.hbm [resolvable:$true] %s248
          %s250 = sshll.u32 [#allocation12], 4
          %s251 = int_to_ptr.vmem [resolvable:$true] %s250
          %256 = dma.hbm_to_vmem [thread:$0]  %s249, 512, %s251, [#allocation13], 128, 128, 8
        $region16: #{tpu_custom_call.1} parent=11 // pred_fallthru
          _
        // Predicated region
        $region17: #{tpu_custom_call.1} parent=11 // pred_check
          %p257 = pneg %p158
        $region18: #{tpu_custom_call.1} parent=11 // pred_check_branch
          %259 = sbr.rel (%p257) target = $region20
        $region19: #{tpu_custom_call.1} parent=11 // pred_region
          %261 = vsyncadd [#allocation13], 0
          %s262 = sshll.u32 %s4, 4
          %s263 = int_to_ptr.hbm [resolvable:$true] %s262
          %s264 = sshll.u32 [#allocation14], 4
          %s265 = int_to_ptr.vmem [resolvable:$true] %s264
          %270 = dma.hbm_to_vmem [thread:$0]  %s263, 512, %s265, [#allocation13], 128, 128, 8
        $region20: #{tpu_custom_call.1} parent=11 // pred_fallthru
          _
        // Predicated region
        $region21: #{tpu_custom_call.1} parent=11 // pred_check
          %p271 = pneg %p179
        $region22: #{tpu_custom_call.1} parent=11 // pred_check_branch
          %273 = sbr.rel (%p271) target = $region24
        $region23: #{tpu_custom_call.1} parent=11 // pred_region
          %275 = vsyncadd [#allocation16], 0
          %s276 = sshll.u32 %s5, 4
          %s277 = int_to_ptr.hbm [resolvable:$true] %s276
          %s278 = sshll.u32 [#allocation15], 4
          %s279 = int_to_ptr.vmem [resolvable:$true] %s278
          %284 = dma.hbm_to_vmem [thread:$0]  %s277, 512, %s279, [#allocation16], 128, 128, 8
        $region24: #{tpu_custom_call.1} parent=11 // pred_fallthru
          _
        // Predicated region
        $region25: #{tpu_custom_call.1} parent=11 // pred_check
          %p285 = pneg %p200
        $region26: #{tpu_custom_call.1} parent=11 // pred_check_branch
          %287 = sbr.rel (%p285) target = $region28
        $region27: #{tpu_custom_call.1} parent=11 // pred_region
          %289 = vsyncadd [#allocation16], 0
          %s290 = sshll.u32 %s6, 4
          %s291 = int_to_ptr.hbm [resolvable:$true] %s290
          %s292 = sshll.u32 [#allocation17], 4
          %s293 = int_to_ptr.vmem [resolvable:$true] %s292
          %298 = dma.hbm_to_vmem [thread:$0]  %s291, 512, %s293, [#allocation16], 128, 128, 8
        $region28: #{tpu_custom_call.1} parent=11 // pred_fallthru
          _
      $region12: #{tpu_custom_call.1} parent=5 // pred_fallthru
        _
      %p299 = scmp.lt.s32.totalorder %s24, 2
      // Predicated region
      $region29: #{tpu_custom_call.1} parent=5 // pred_check
        %p300 = pneg %p299
      $region30: #{tpu_custom_call.1} parent=5 // pred_check_branch
        %302 = sbr.rel (%p300) target = $region32
      $region31: #{tpu_custom_call.1} parent=5 // pred_region
        // Predicated region
        $region33: #{tpu_custom_call.1} parent=31 // pred_check
          %p303 = pneg %p58
        $region34: #{tpu_custom_call.1} parent=31 // pred_check_branch
          %305 = sbr.rel (%p303) target = $region36
        $region35: #{tpu_custom_call.1} parent=31 // pred_region
          %s306 = sand.u32 %s48, 1
          %s307 = scalar_lea.sflag [#allocation7], %s306
          %s308 = sand.u32 %s48, 1
          %s309 = smul.addr %s308, 8
          %s310 = scalar_lea.vmem [#allocation6], %s309
          %312 = vsyncadd %s307, 0
          %s313 = sadd.s32 %s32, %s31
          %s314 = smul.addr %s313, 8
          %s315 = scalar_lea.hbm %s0, %s314
          %s317 = sshll.u32 %s315, 4
          %s318 = int_to_ptr.hbm [resolvable:$true] %s317
          %s319 = sshll.u32 %s310, 4
          %s320 = int_to_ptr.vmem [resolvable:$true] %s319
          %322 = dma.hbm_to_vmem [thread:$0]  %s318, 128, %s320, %s307
        $region36: #{tpu_custom_call.1} parent=31 // pred_fallthru
          _
        // Predicated region
        $region37: #{tpu_custom_call.1} parent=31 // pred_check
          %p323 = pneg %p84
        $region38: #{tpu_custom_call.1} parent=31 // pred_check_branch
          %325 = sbr.rel (%p323) target = $region40
        $region39: #{tpu_custom_call.1} parent=31 // pred_region
          %s326 = sand.u32 %s24, 1
          %s327 = scalar_lea.sflag [#allocation10], %s326
          %s328 = sand.u32 %s74, 1
          %s329 = smul.addr %s328, 8
          %s330 = scalar_lea.vmem [#allocation9], %s329
          %332 = vsyncadd %s327, 0
          %s333 = smul.addr %s31, 8
          %s334 = scalar_lea.hbm %s1, %s333
          %s336 = sshll.u32 %s334, 4
          %s337 = int_to_ptr.hbm [resolvable:$true] %s336
          %s338 = sshll.u32 %s330, 4
          %s339 = int_to_ptr.vmem [resolvable:$true] %s338
          %341 = dma.hbm_to_vmem [thread:$0]  %s337, 128, %s339, %s327
        $region40: #{tpu_custom_call.1} parent=31 // pred_fallthru
          _
        // Predicated region
        $region41: #{tpu_custom_call.1} parent=31 // pred_check
          %p342 = pneg %p110
        $region42: #{tpu_custom_call.1} parent=31 // pred_check_branch
          %344 = sbr.rel (%p342) target = $region44
        $region43: #{tpu_custom_call.1} parent=31 // pred_region
          %s345 = sand.u32 %s24, 1
          %s346 = scalar_lea.sflag [#allocation10], %s345
          %s347 = sand.u32 %s100, 1
          %s348 = smul.addr %s347, 8
          %s349 = scalar_lea.vmem [#allocation11], %s348
          %351 = vsyncadd %s346, 0
          %s352 = smul.addr %s31, 8
          %s353 = scalar_lea.hbm %s2, %s352
          %s355 = sshll.u32 %s353, 4
          %s356 = int_to_ptr.hbm [resolvable:$true] %s355
          %s357 = sshll.u32 %s349, 4
          %s358 = int_to_ptr.vmem [resolvable:$true] %s357
          %360 = dma.hbm_to_vmem [thread:$0]  %s356, 128, %s358, %s346
        $region44: #{tpu_custom_call.1} parent=31 // pred_fallthru
          _
      $region32: #{tpu_custom_call.1} parent=5 // pred_fallthru
        _
      %p361 = scmp.le.s32.totalorder 1, %s24
      %p362 = scmp.lt.s32.totalorder %s24, 3
      %p363 = pnand %p361, %p362
      %p364 = pneg %p363
      // Predicated region
      $region45: #{tpu_custom_call.1} parent=5 // pred_check
        _
      $region46: #{tpu_custom_call.1} parent=5 // pred_check_branch
        %366 = sbr.rel (%p363) target = $region48
      $region47: #{tpu_custom_call.1} parent=5 // pred_region
        %s367 = ssub.s32 %s24, 1
        %s368 = sand.u32 %s51, 1
        %s369 = scalar_lea.sflag [#allocation7], %s368
        %s370 = sand.u32 %s51, 1
        %s371 = smul.addr %s370, 8
        %s372 = scalar_lea.vmem [#allocation6], %s371
        // Predicated region
        $region49: #{tpu_custom_call.1} parent=47 // pred_check
          %p373 = pneg %p64
        $region50: #{tpu_custom_call.1} parent=47 // pred_check_branch
          %375 = sbr.rel (%p373) target = $region52
        $region51: #{tpu_custom_call.1} parent=47 // pred_region
          %377 = dma.done %s369, 128
        $region52: #{tpu_custom_call.1} parent=47 // pred_fallthru
          _
        %s378 = sand.u32 %s29, 1
        %s379 = scalar_lea.sflag [#allocation10], %s378
        %s380 = sand.u32 %s77, 1
        %s381 = smul.addr %s380, 8
        %s382 = scalar_lea.vmem [#allocation9], %s381
        // Predicated region
        $region53: #{tpu_custom_call.1} parent=47 // pred_check
          %p383 = pneg %p90
        $region54: #{tpu_custom_call.1} parent=47 // pred_check_branch
          %385 = sbr.rel (%p383) target = $region56
        $region55: #{tpu_custom_call.1} parent=47 // pred_region
          %387 = dma.done %s379, 128
        $region56: #{tpu_custom_call.1} parent=47 // pred_fallthru
          _
        %s388 = sand.u32 %s29, 1
        %s389 = scalar_lea.sflag [#allocation10], %s388
        %s390 = sand.u32 %s103, 1
        %s391 = smul.addr %s390, 8
        %s392 = scalar_lea.vmem [#allocation11], %s391
        // Predicated region
        $region57: #{tpu_custom_call.1} parent=47 // pred_check
          %p393 = pneg %p116
        $region58: #{tpu_custom_call.1} parent=47 // pred_check_branch
          %395 = sbr.rel (%p393) target = $region60
        $region59: #{tpu_custom_call.1} parent=47 // pred_region
          %397 = dma.done %s389, 128
        $region60: #{tpu_custom_call.1} parent=47 // pred_fallthru
          _
        // Predicated region
        $region61: #{tpu_custom_call.1} parent=47 // pred_check
          %p398 = pneg %p137
        $region62: #{tpu_custom_call.1} parent=47 // pred_check_branch
          %400 = sbr.rel (%p398) target = $region64
        $region63: #{tpu_custom_call.1} parent=47 // pred_region
          %402 = dma.done [#allocation13], 512
        $region64: #{tpu_custom_call.1} parent=47 // pred_fallthru
          _
        // Predicated region
        $region65: #{tpu_custom_call.1} parent=47 // pred_check
          %p403 = pneg %p158
        $region66: #{tpu_custom_call.1} parent=47 // pred_check_branch
          %405 = sbr.rel (%p403) target = $region68
        $region67: #{tpu_custom_call.1} parent=47 // pred_region
          %407 = dma.done [#allocation13], 512
        $region68: #{tpu_custom_call.1} parent=47 // pred_fallthru
          _
        // Predicated region
        $region69: #{tpu_custom_call.1} parent=47 // pred_check
          %p408 = pneg %p179
        $region70: #{tpu_custom_call.1} parent=47 // pred_check_branch
          %410 = sbr.rel (%p408) target = $region72
        $region71: #{tpu_custom_call.1} parent=47 // pred_region
          %412 = dma.done [#allocation16], 512
        $region72: #{tpu_custom_call.1} parent=47 // pred_fallthru
          _
        // Predicated region
        $region73: #{tpu_custom_call.1} parent=47 // pred_check
          %p413 = pneg %p200
        $region74: #{tpu_custom_call.1} parent=47 // pred_check_branch
          %415 = sbr.rel (%p413) target = $region76
        $region75: #{tpu_custom_call.1} parent=47 // pred_region
          %417 = dma.done [#allocation16], 512
        $region76: #{tpu_custom_call.1} parent=47 // pred_fallthru
          _
        %s418 = sand.u32 %s51, 1
        %s419 = scalar_lea.sflag [#allocation7], %s418
        %s420 = sand.u32 %s51, 1
        %s421 = smul.addr %s420, 8
        %s422 = scalar_lea.vmem [#allocation6], %s421
        %p423 = pneg %p64
        %p424 = pneg %p61
        %s425 = sand.u32 %s29, 1
        %s426 = scalar_lea.sflag [#allocation10], %s425
        %s427 = sand.u32 %s77, 1
        %s428 = smul.addr %s427, 8
        %s429 = scalar_lea.vmem [#allocation9], %s428
        %p430 = pneg %p90
        %p431 = pneg %p87
        %s432 = sand.u32 %s29, 1
        %s433 = scalar_lea.sflag [#allocation10], %s432
        %s434 = sand.u32 %s103, 1
        %s435 = smul.addr %s434, 8
        %s436 = scalar_lea.vmem [#allocation11], %s435
        %p437 = pneg %p116
        %p438 = pneg %p113
        %p439 = pneg %p137
        %p440 = pneg %p134
        %p441 = pneg %p158
        %p442 = pneg %p155
        %p443 = pneg %p179
        %p444 = pneg %p176
        %p445 = pneg %p200
        %p446 = pneg %p197
        %p447 = pneg %p228
        %p448 = pneg %p225
        %s449 = sand.u32 %s215, 1
        %s450 = scalar_lea.sflag [#allocation8], %s449
        %s451 = sand.u32 %s215, 1
        %s452 = smul.addr %s451, 8
        %s453 = scalar_lea.vmem [#allocation18], %s452
        %p454 = scmp.eq.s32.totalorder %s34, 0
        // Predicated region
        $region77: #{tpu_custom_call.1} parent=47 // pred_check
          %p455 = pneg %p454
        $region78: #{tpu_custom_call.1} parent=47 // pred_check_branch
          %457 = sbr.rel (%p455) target = $region80
        $region79: #{tpu_custom_call.1} parent=47 // pred_region
          %v458 = vld [vmem:[%s382] sm:$0xff]
          %v459 = vld [vmem:[#allocation14] sm:$0xff]
          %v460 = vld [vmem:[#allocation14 + $0x8] sm:$0xff]
          %v461 = vld [vmem:[#allocation14 + $0x10] sm:$0xff]
          %v462 = vld [vmem:[#allocation14 + $0x18] sm:$0xff]
          %vm463 = vcmask 261120
          %v465 = vsel %vm463, %v458, 0
          %467 = vmatpush.msra.mxu0 0.0
          %468 = vmatpush.msra.mxu0 0.0
          %469 = vmatpush.msra.mxu0 0.0
          %470 = vmatpush.msra.mxu0 0.0
          %471 = vmatpush.msra.mxu0 0.0
          %472 = vmatpush.msra.mxu0 0.0
          %473 = vmatpush.msra.mxu0 0.0
          %474 = vmatpush.msra.mxu0 0.0
          %475 = vmatpush.msra.mxu0 0.0
          %476 = vmatpush.msra.mxu0 0.0
          %477 = vmatpush.msra.mxu0 0.0
          %478 = vmatpush.msra.mxu0 0.0
          %479 = vmatpush.msra.mxu0 %v462
          %480 = vmatpush.msra.mxu0 %v461
          %481 = vmatpush.msra.mxu0 %v460
          %482 = vmatpush.msra.mxu0 %v459
          %483 = vmatmul.f32.gmra.mxu0 %v465
          %v484 = vpop.f32.mrf.mxu0
          %v485 = vadd.f32 0.0, %v484
          %486 = vdwg.mxu0
          %487 = vst.msk [vmem:[#allocation3] sm:$0xff] %vm463, %v485
          %v488 = vld [vmem:[%s392] sm:$0xff]
          %v489 = vld [vmem:[#allocation15] sm:$0xff]
          %v490 = vld [vmem:[#allocation15 + $0x8] sm:$0xff]
          %v491 = vld [vmem:[#allocation15 + $0x10] sm:$0xff]
          %v492 = vld [vmem:[#allocation15 + $0x18] sm:$0xff]
          %v494 = vsel %vm463, %v488, 0
          %496 = vmatpush.msra.mxu0 0.0
          %497 = vmatpush.msra.mxu0 0.0
          %498 = vmatpush.msra.mxu0 0.0
          %499 = vmatpush.msra.mxu0 0.0
          %500 = vmatpush.msra.mxu0 0.0
          %501 = vmatpush.msra.mxu0 0.0
          %502 = vmatpush.msra.mxu0 0.0
          %503 = vmatpush.msra.mxu0 0.0
          %504 = vmatpush.msra.mxu0 0.0
          %505 = vmatpush.msra.mxu0 0.0
          %506 = vmatpush.msra.mxu0 0.0
          %507 = vmatpush.msra.mxu0 0.0
          %508 = vmatpush.msra.mxu0 %v492
          %509 = vmatpush.msra.mxu0 %v491
          %510 = vmatpush.msra.mxu0 %v490
          %511 = vmatpush.msra.mxu0 %v489
          %512 = vmatmul.f32.gmra.mxu0 %v494
          %v513 = vpop.f32.mrf.mxu0
          %v514 = vadd.f32 0.0, %v513
          %515 = vdwg.mxu0
          %516 = vst.msk [vmem:[#allocation4] sm:$0xff] %vm463, %v514
        $region80: #{tpu_custom_call.1} parent=47 // pred_fallthru
          _
        %v517 = vld [vmem:[%s372] sm:$0xff]
        %v518 = vld [vmem:[#allocation12] sm:$0xff]
        %v519 = vld [vmem:[#allocation12 + $0x8] sm:$0xff]
        %v520 = vld [vmem:[#allocation12 + $0x10] sm:$0xff]
        %v521 = vld [vmem:[#allocation12 + $0x18] sm:$0xff]
        %vm522 = vcmask 261120
        %v524 = vsel %vm522, %v517, 0
        %526 = vmatpush.msra.mxu0 0.0
        %527 = vmatpush.msra.mxu0 0.0
        %528 = vmatpush.msra.mxu0 0.0
        %529 = vmatpush.msra.mxu0 0.0
        %530 = vmatpush.msra.mxu0 0.0
        %531 = vmatpush.msra.mxu0 0.0
        %532 = vmatpush.msra.mxu0 0.0
        %533 = vmatpush.msra.mxu0 0.0
        %534 = vmatpush.msra.mxu0 0.0
        %535 = vmatpush.msra.mxu0 0.0
        %536 = vmatpush.msra.mxu0 0.0
        %537 = vmatpush.msra.mxu0 0.0
        %538 = vmatpush.msra.mxu0 %v521
        %539 = vmatpush.msra.mxu0 %v520
        %540 = vmatpush.msra.mxu0 %v519
        %541 = vmatpush.msra.mxu0 %v518
        %542 = vmatmul.f32.gmra.mxu0 %v524
        %v543 = vpop.f32.mrf.mxu0
        %v544 = vadd.f32 0.0, %v543
        %545 = vdwg.mxu0
        %546 = vst.msk [vmem:[#allocation2] sm:$0xff] %vm522, %v544
        %v547 = vld [vmem:[#allocation2] sm:$0xff]
        %v548 = vld [vmem:[#allocation3] sm:$0xff]
        %v549 = vld [vmem:[#allocation4] sm:$0xff]
        %vm550 = vcmask 64512
        %v552 = vsel %vm550, %v547, 0
        %v555 = vsel %vm550, %v548, 0
        %557 = vmatpush.xpose.msra.mxu0 0.0
        %558 = vmatpush.xpose.msra.mxu0 0.0
        %559 = vmatpush.xpose.msra.mxu0 0.0
        %560 = vmatpush.xpose.msra.mxu0 0.0
        %561 = vmatpush.xpose.msra.mxu0 0.0
        %562 = vmatpush.xpose.msra.mxu0 0.0
        %563 = vmatpush.xpose.msra.mxu0 0.0
        %564 = vmatpush.xpose.msra.mxu0 0.0
        %565 = vmatpush.xpose.msra.mxu0 0.0
        %566 = vmatpush.xpose.msra.mxu0 0.0
        %567 = vmatpush.xpose.msra.mxu0 0.0
        %568 = vmatpush.xpose.msra.mxu0 0.0
        %569 = vmatpush.xpose.msra.mxu0 0.0
        %570 = vmatpush.xpose.msra.mxu0 0.0
        %571 = vmatpush.xpose.msra.mxu0 0.0
        %572 = vmatpush.xpose.msra.mxu0 %v555
        %573 = vmatmul.f32.gmra.mxu0 %v552
        %v574 = vpop.f32.mrf.mxu0
        %v575 = vadd.f32 0.0, %v574
        %576 = vdwg.mxu0
        %v577 = vmul.f32 %v575, 0.35355338
        %v578 = vsel %vm550, %v577, -inf
        %579 = vmax.xlane.f32.xlu0 %v578
        %v580 = vpop.xlane.xlu0 %579
        %v581 = vsub.f32 %v577, %v580
        %v582 = vmul.f32 %v581, 1.442695
        %v583 = vpow.pop %v582
        %v584 = vsel %vm550, %v583, 0.0
        %585 = vadd.xlane.f32.xlu0 %v584
        %v586 = vpop.xlane.xlu0 %585
        %v587 = vrcp.pop %v586
        %v588 = vmul.f32 %v583, %v587
        %v590 = vsel %vm550, %v588, 0
        %592 = vmatpush.msra.mxu0 0.0
        %593 = vmatpush.msra.mxu0 0.0
        %594 = vmatpush.msra.mxu0 0.0
        %595 = vmatpush.msra.mxu0 0.0
        %596 = vmatpush.msra.mxu0 0.0
        %597 = vmatpush.msra.mxu0 0.0
        %598 = vmatpush.msra.mxu0 0.0
        %599 = vmatpush.msra.mxu0 0.0
        %600 = vmatpush.msra.mxu0 0.0
        %601 = vmatpush.msra.mxu0 0.0
        %602 = vmatpush.msra.mxu0 0.0
        %603 = vmatpush.msra.mxu0 0.0
        %604 = vmatpush.msra.mxu0 0.0
        %605 = vmatpush.msra.mxu0 0.0
        %606 = vmatpush.msra.mxu0 0.0
        %607 = vmatpush.msra.mxu0 %v549
        %608 = vmatmul.f32.gmra.mxu0 %v590
        %v609 = vpop.f32.mrf.mxu0
        %v610 = vadd.f32 0.0, %v609
        %611 = vdwg.mxu0
        %612 = vst.msk [vmem:[#allocation5] sm:$0xff] %vm550, %v610
        %v613 = vld [vmem:[#allocation2] sm:$0xff]
        %v614 = vld [vmem:[#allocation3] sm:$0xff]
        %v615 = vld [vmem:[#allocation4] sm:$0xff]
        %617 = vrot.lane.b32.xlu0 %v613, 120
        %v618 = vpop.permute.xlu0 %617
        %620 = vrot.lane.b32.xlu0 %v614, 120
        %v621 = vpop.permute.xlu0 %620
        %v622 = vsel %vm550, %v618, 0
        %v624 = vsel %vm550, %v621, 0
        %626 = vmatpush.xpose.msra.mxu0 0.0
        %627 = vmatpush.xpose.msra.mxu0 0.0
        %628 = vmatpush.xpose.msra.mxu0 0.0
        %629 = vmatpush.xpose.msra.mxu0 0.0
        %630 = vmatpush.xpose.msra.mxu0 0.0
        %631 = vmatpush.xpose.msra.mxu0 0.0
        %632 = vmatpush.xpose.msra.mxu0 0.0
        %633 = vmatpush.xpose.msra.mxu0 0.0
        %634 = vmatpush.xpose.msra.mxu0 0.0
        %635 = vmatpush.xpose.msra.mxu0 0.0
        %636 = vmatpush.xpose.msra.mxu0 0.0
        %637 = vmatpush.xpose.msra.mxu0 0.0
        %638 = vmatpush.xpose.msra.mxu0 0.0
        %639 = vmatpush.xpose.msra.mxu0 0.0
        %640 = vmatpush.xpose.msra.mxu0 0.0
        %641 = vmatpush.xpose.msra.mxu0 %v624
        %642 = vmatmul.f32.gmra.mxu0 %v622
        %v643 = vpop.f32.mrf.mxu0
        %v644 = vadd.f32 0.0, %v643
        %645 = vdwg.mxu0
        %v646 = vmul.f32 %v644, 0.35355338
        %v647 = vsel %vm550, %v646, -inf
        %648 = vmax.xlane.f32.xlu0 %v647
        %v649 = vpop.xlane.xlu0 %648
        %v650 = vsub.f32 %v646, %v649
        %v651 = vmul.f32 %v650, 1.442695
        %v652 = vpow.pop %v651
        %v653 = vsel %vm550, %v652, 0.0
        %654 = vadd.xlane.f32.xlu0 %v653
        %v655 = vpop.xlane.xlu0 %654
        %v656 = vrcp.pop %v655
        %v657 = vmul.f32 %v652, %v656
        %659 = vrot.lane.b32.xlu0 %v615, 120
        %v660 = vpop.permute.xlu0 %659
        %v663 = vsel %vm550, %v657, 0
        %665 = vmatpush.msra.mxu0 0.0
        %666 = vmatpush.msra.mxu0 0.0
        %667 = vmatpush.msra.mxu0 0.0
        %668 = vmatpush.msra.mxu0 0.0
        %669 = vmatpush.msra.mxu0 0.0
        %670 = vmatpush.msra.mxu0 0.0
        %671 = vmatpush.msra.mxu0 0.0
        %672 = vmatpush.msra.mxu0 0.0
        %673 = vmatpush.msra.mxu0 0.0
        %674 = vmatpush.msra.mxu0 0.0
        %675 = vmatpush.msra.mxu0 0.0
        %676 = vmatpush.msra.mxu0 0.0
        %677 = vmatpush.msra.mxu0 0.0
        %678 = vmatpush.msra.mxu0 0.0
        %679 = vmatpush.msra.mxu0 0.0
        %680 = vmatpush.msra.mxu0 %v660
        %681 = vmatmul.f32.gmra.mxu0 %v663
        %v682 = vpop.f32.mrf.mxu0
        %v683 = vadd.f32 0.0, %v682
        %684 = vdwg.mxu0
        %686 = vrot.lane.b32.xlu0 %v683, 8
        %v687 = vpop.permute.xlu0 %686
        %vm689 = vcmask 130112
        %690 = vst.msk [vmem:[#allocation5] sm:$0xff] %vm689, %v687
        %v691 = vld [vmem:[#allocation2] sm:$0xff]
        %v692 = vld [vmem:[#allocation3] sm:$0xff]
        %v693 = vld [vmem:[#allocation4] sm:$0xff]
        %695 = vrot.lane.b32.xlu0 %v691, 112
        %v696 = vpop.permute.xlu0 %695
        %698 = vrot.lane.b32.xlu0 %v692, 112
        %v699 = vpop.permute.xlu0 %698
        %v700 = vsel %vm550, %v696, 0
        %v702 = vsel %vm550, %v699, 0
        %704 = vmatpush.xpose.msra.mxu0 0.0
        %705 = vmatpush.xpose.msra.mxu0 0.0
        %706 = vmatpush.xpose.msra.mxu0 0.0
        %707 = vmatpush.xpose.msra.mxu0 0.0
        %708 = vmatpush.xpose.msra.mxu0 0.0
        %709 = vmatpush.xpose.msra.mxu0 0.0
        %710 = vmatpush.xpose.msra.mxu0 0.0
        %711 = vmatpush.xpose.msra.mxu0 0.0
        %712 = vmatpush.xpose.msra.mxu0 0.0
        %713 = vmatpush.xpose.msra.mxu0 0.0
        %714 = vmatpush.xpose.msra.mxu0 0.0
        %715 = vmatpush.xpose.msra.mxu0 0.0
        %716 = vmatpush.xpose.msra.mxu0 0.0
        %717 = vmatpush.xpose.msra.mxu0 0.0
        %718 = vmatpush.xpose.msra.mxu0 0.0
        %719 = vmatpush.xpose.msra.mxu0 %v702
        %720 = vmatmul.f32.gmra.mxu0 %v700
        %v721 = vpop.f32.mrf.mxu0
        %v722 = vadd.f32 0.0, %v721
        %723 = vdwg.mxu0
        %v724 = vmul.f32 %v722, 0.35355338
        %v725 = vsel %vm550, %v724, -inf
        %726 = vmax.xlane.f32.xlu0 %v725
        %v727 = vpop.xlane.xlu0 %726
        %v728 = vsub.f32 %v724, %v727
        %v729 = vmul.f32 %v728, 1.442695
        %v730 = vpow.pop %v729
        %v731 = vsel %vm550, %v730, 0.0
        %732 = vadd.xlane.f32.xlu0 %v731
        %v733 = vpop.xlane.xlu0 %732
        %v734 = vrcp.pop %v733
        %v735 = vmul.f32 %v730, %v734
        %737 = vrot.lane.b32.xlu0 %v693, 112
        %v738 = vpop.permute.xlu0 %737
        %v741 = vsel %vm550, %v735, 0
        %743 = vmatpush.msra.mxu0 0.0
        %744 = vmatpush.msra.mxu0 0.0
        %745 = vmatpush.msra.mxu0 0.0
        %746 = vmatpush.msra.mxu0 0.0
        %747 = vmatpush.msra.mxu0 0.0
        %748 = vmatpush.msra.mxu0 0.0
        %749 = vmatpush.msra.mxu0 0.0
        %750 = vmatpush.msra.mxu0 0.0
        %751 = vmatpush.msra.mxu0 0.0
        %752 = vmatpush.msra.mxu0 0.0
        %753 = vmatpush.msra.mxu0 0.0
        %754 = vmatpush.msra.mxu0 0.0
        %755 = vmatpush.msra.mxu0 0.0
        %756 = vmatpush.msra.mxu0 0.0
        %757 = vmatpush.msra.mxu0 0.0
        %758 = vmatpush.msra.mxu0 %v738
        %759 = vmatmul.f32.gmra.mxu0 %v741
        %v760 = vpop.f32.mrf.mxu0
        %v761 = vadd.f32 0.0, %v760
        %762 = vdwg.mxu0
        %764 = vrot.lane.b32.xlu0 %v761, 16
        %v765 = vpop.permute.xlu0 %764
        %vm767 = vcmask 195712
        %768 = vst.msk [vmem:[#allocation5] sm:$0xff] %vm767, %v765
        %v769 = vld [vmem:[#allocation2] sm:$0xff]
        %v770 = vld [vmem:[#allocation3] sm:$0xff]
        %v771 = vld [vmem:[#allocation4] sm:$0xff]
        %773 = vrot.lane.b32.xlu0 %v769, 104
        %v774 = vpop.permute.xlu0 %773
        %776 = vrot.lane.b32.xlu0 %v770, 104
        %v777 = vpop.permute.xlu0 %776
        %v778 = vsel %vm550, %v774, 0
        %v780 = vsel %vm550, %v777, 0
        %782 = vmatpush.xpose.msra.mxu0 0.0
        %783 = vmatpush.xpose.msra.mxu0 0.0
        %784 = vmatpush.xpose.msra.mxu0 0.0
        %785 = vmatpush.xpose.msra.mxu0 0.0
        %786 = vmatpush.xpose.msra.mxu0 0.0
        %787 = vmatpush.xpose.msra.mxu0 0.0
        %788 = vmatpush.xpose.msra.mxu0 0.0
        %789 = vmatpush.xpose.msra.mxu0 0.0
        %790 = vmatpush.xpose.msra.mxu0 0.0
        %791 = vmatpush.xpose.msra.mxu0 0.0
        %792 = vmatpush.xpose.msra.mxu0 0.0
        %793 = vmatpush.xpose.msra.mxu0 0.0
        %794 = vmatpush.xpose.msra.mxu0 0.0
        %795 = vmatpush.xpose.msra.mxu0 0.0
        %796 = vmatpush.xpose.msra.mxu0 0.0
        %797 = vmatpush.xpose.msra.mxu0 %v780
        %798 = vmatmul.f32.gmra.mxu0 %v778
        %v799 = vpop.f32.mrf.mxu0
        %v800 = vadd.f32 0.0, %v799
        %801 = vdwg.mxu0
        %v802 = vmul.f32 %v800, 0.35355338
        %v803 = vsel %vm550, %v802, -inf
        %804 = vmax.xlane.f32.xlu0 %v803
        %v805 = vpop.xlane.xlu0 %804
        %v806 = vsub.f32 %v802, %v805
        %v807 = vmul.f32 %v806, 1.442695
        %v808 = vpow.pop %v807
        %v809 = vsel %vm550, %v808, 0.0
        %810 = vadd.xlane.f32.xlu0 %v809
        %v811 = vpop.xlane.xlu0 %810
        %v812 = vrcp.pop %v811
        %v813 = vmul.f32 %v808, %v812
        %815 = vrot.lane.b32.xlu0 %v771, 104
        %v816 = vpop.permute.xlu0 %815
        %v819 = vsel %vm550, %v813, 0
        %821 = vmatpush.msra.mxu0 0.0
        %822 = vmatpush.msra.mxu0 0.0
        %823 = vmatpush.msra.mxu0 0.0
        %824 = vmatpush.msra.mxu0 0.0
        %825 = vmatpush.msra.mxu0 0.0
        %826 = vmatpush.msra.mxu0 0.0
        %827 = vmatpush.msra.mxu0 0.0
        %828 = vmatpush.msra.mxu0 0.0
        %829 = vmatpush.msra.mxu0 0.0
        %830 = vmatpush.msra.mxu0 0.0
        %831 = vmatpush.msra.mxu0 0.0
        %832 = vmatpush.msra.mxu0 0.0
        %833 = vmatpush.msra.mxu0 0.0
        %834 = vmatpush.msra.mxu0 0.0
        %835 = vmatpush.msra.mxu0 0.0
        %836 = vmatpush.msra.mxu0 %v816
        %837 = vmatmul.f32.gmra.mxu0 %v819
        %v838 = vpop.f32.mrf.mxu0
        %v839 = vadd.f32 0.0, %v838
        %840 = vdwg.mxu0
        %842 = vrot.lane.b32.xlu0 %v839, 24
        %v843 = vpop.permute.xlu0 %842
        %vm845 = vcmask 261312
        %846 = vst.msk [vmem:[#allocation5] sm:$0xff] %vm845, %v843
        %v847 = vld [vmem:[#allocation5] sm:$0xff]
        %v848 = vld [vmem:[#allocation17] sm:$0xff]
        %v849 = vld [vmem:[#allocation17 + $0x8] sm:$0xff]
        %v850 = vld [vmem:[#allocation17 + $0x10] sm:$0xff]
        %v851 = vld [vmem:[#allocation17 + $0x18] sm:$0xff]
        %v853 = vsel %vm522, %v847, 0
        %855 = vmatpush.msra.mxu0 0.0
        %856 = vmatpush.msra.mxu0 0.0
        %857 = vmatpush.msra.mxu0 0.0
        %858 = vmatpush.msra.mxu0 0.0
        %859 = vmatpush.msra.mxu0 0.0
        %860 = vmatpush.msra.mxu0 0.0
        %861 = vmatpush.msra.mxu0 0.0
        %862 = vmatpush.msra.mxu0 0.0
        %863 = vmatpush.msra.mxu0 0.0
        %864 = vmatpush.msra.mxu0 0.0
        %865 = vmatpush.msra.mxu0 0.0
        %866 = vmatpush.msra.mxu0 0.0
        %867 = vmatpush.msra.mxu0 %v851
        %868 = vmatpush.msra.mxu0 %v850
        %869 = vmatpush.msra.mxu0 %v849
        %870 = vmatpush.msra.mxu0 %v848
        %871 = vmatmul.f32.gmra.mxu0 %v853
        %v872 = vpop.f32.mrf.mxu0
        %v873 = vadd.f32 0.0, %v872
        %874 = vdwg.mxu0
        %875 = vst.msk [vmem:[%s453] sm:$0xff] %vm522, %v873
        %s876 = sand.u32 %s215, 1
        %s877 = scalar_lea.sflag [#allocation8], %s876
        %s878 = sand.u32 %s215, 1
        %s879 = smul.addr %s878, 8
        %s880 = scalar_lea.vmem [#allocation18], %s879
        // Predicated region
        $region81: #{tpu_custom_call.1} parent=47 // pred_check
          %p881 = pneg %p225
        $region82: #{tpu_custom_call.1} parent=47 // pred_check_branch
          %883 = sbr.rel (%p881) target = $region84
        $region83: #{tpu_custom_call.1} parent=47 // pred_region
          %885 = vsyncadd %s877, 0
          %s886 = sadd.s32 %s34, %s33
          %s887 = smul.addr %s886, 8
          %s888 = scalar_lea.hbm %s7, %s887
          %s890 = sshll.u32 %s880, 4
          %s891 = int_to_ptr.vmem [resolvable:$true] %s890
          %s892 = sshll.u32 %s888, 4
          %s893 = int_to_ptr.hbm [resolvable:$true] %s892
          %895 = dma.vmem_to_hbm [thread:$0]  %s891, 128, %s893, %s877
        $region84: #{tpu_custom_call.1} parent=47 // pred_fallthru
          _
      $region48: #{tpu_custom_call.1} parent=5 // pred_fallthru
        _
      %p896 = scmp.le.s32.totalorder 2, %s24
      // Predicated region
      $region85: #{tpu_custom_call.1} parent=5 // pred_check
        %p897 = pneg %p896
      $region86: #{tpu_custom_call.1} parent=5 // pred_check_branch
        %899 = sbr.rel (%p897) target = $region88
      $region87: #{tpu_custom_call.1} parent=5 // pred_region
        %s900 = ssub.s32 %s24, 2
        // Predicated region
        $region89: #{tpu_custom_call.1} parent=87 // pred_check
          %p901 = pneg %p231
        $region90: #{tpu_custom_call.1} parent=87 // pred_check_branch
          %903 = sbr.rel (%p901) target = $region92
        $region91: #{tpu_custom_call.1} parent=87 // pred_region
          %s904 = sand.u32 %s216, 1
          %s905 = scalar_lea.sflag [#allocation8], %s904
          %s906 = sand.u32 %s216, 1
          %s907 = smul.addr %s906, 8
          %s908 = scalar_lea.vmem [#allocation18], %s907
          %910 = dma.done %s905, 128
        $region92: #{tpu_custom_call.1} parent=87 // pred_fallthru
          _
      $region88: #{tpu_custom_call.1} parent=5 // pred_fallthru
        _
    $region6: #{tpu_custom_call.1} parent=1 // loop_footer
      %s28 = sadd.s32 1, %s24
    $region7: #{tpu_custom_call.1} parent=1 // loop_footer_branch
      %23 = sbr.rel target = $region3
    $region8: #{tpu_custom_call.1} parent=1 // loop_exit
      _
    %911 = vsyncpa [#allocation7], 1
    %s912 = scalar_lea.sflag [#allocation7], 1
    %913 = vsyncpa %s912, 1
    %914 = vsyncpa [#allocation10], 1
    %s915 = scalar_lea.sflag [#allocation10], 1
    %916 = vsyncpa %s915, 1
    %917 = vsyncpa [#allocation13], 1
    %918 = vsyncpa [#allocation16], 1
    %919 = vsyncpa [#allocation8], 1
    %s920 = scalar_lea.sflag [#allocation8], 1
    %921 = vsyncpa %s920, 1

</llo_original>
